<compile_context>
chip_gen: v7x
topology: tpu7x:2x2x1
jax: 0.10.0
libtpu: 0.0.40
codegen_flags: <defaults>
</compile_context>

<pallas_src>
import jax
import jax.numpy as jnp
from jax.experimental import pallas as pl
from jax.experimental.pallas import tpu as pltpu


LEAKY_SLOPE = 0.01  # nn.LeakyReLU default negative_slope


def _round_up(x, m):
    return ((x + m - 1) // m) * m


def _mlp_kernel(x_ref, w1_ref, b1_ref, w2_ref, b2_ref, w3_ref, b3_ref, o_ref):
    """Fused 3-layer MLP on one (block_m, D0) batch tile.

    Matmul operands are cast to the weight dtype inside the kernel (no extra
    HBM pass when weights are bf16); accumulation and activations are f32.
    """
    w_dtype = w1_ref.dtype
    x = x_ref[...].astype(w_dtype)

    # Layer 1: Linear + LeakyReLU.
    h = jnp.dot(x, w1_ref[...], preferred_element_type=jnp.float32) + b1_ref[...]
    h = jnp.maximum(h, LEAKY_SLOPE * h)

    # Layer 2: Linear + LeakyReLU.
    h = jnp.dot(h.astype(w_dtype), w2_ref[...],
                preferred_element_type=jnp.float32) + b2_ref[...]
    h = jnp.maximum(h, LEAKY_SLOPE * h)

    # Layer 3 (out_features = 1) + exact sigmoid.
    logits = jnp.dot(h.astype(w_dtype), w3_ref[...],
                     preferred_element_type=jnp.float32) + b3_ref[...]
    o_ref[...] = (1.0 / (1.0 + jnp.exp(-logits))).astype(o_ref.dtype)


def discriminator_forward(x, params, *, block_m=8192, num_cores=1,
                          compute_dtype=None, vmem_limit_bytes=None):
    """Fused Discriminator forward with a Pallas TPU kernel.

    x:      (B, input_size) float32
    params: dict with w1 (D0,D1), b1 (1,D1), w2 (D1,D2), b2 (1,D2),
            w3 (D2,1),  b3 (1,1)
    block_m:       batch-tile size target (rounded to a multiple of 128).
    num_cores:     pass 2 on v7x so both TensorCores get at least one tile.
    compute_dtype: optional matmul-operand dtype (e.g. jnp.bfloat16 on
                   v6e/v7x); weights are pre-cast (tiny), x is cast in-kernel,
                   accumulation stays f32.
    vmem_limit_bytes: optional scoped-VMEM override (only needed if sweeping
                   block_m well past ~16K rows).
    returns (B, 1) float32 in [0, 1].
    """
    B, D0 = x.shape
    w1, b1 = params["w1"], params["b1"]
    w2, b2 = params["w2"], params["b2"]
    w3, b3 = params["w3"], params["b3"]
    D1 = w1.shape[1]
    D2 = w2.shape[1]

    if compute_dtype is not None:
        w1 = w1.astype(compute_dtype)
        w2 = w2.astype(compute_dtype)
        w3 = w3.astype(compute_dtype)
    # Biases are added to the f32 accumulator.
    b1 = b1.astype(jnp.float32)
    b2 = b2.astype(jnp.float32)
    b3 = b3.astype(jnp.float32)

    # Batch tile: multiple of 128, capped so that (a) we don't over-tile tiny
    # batches and (b) with num_cores=2 (v7x) there are >= 2 tiles to shard.
    per_core = _round_up(pl.cdiv(B, max(1, num_cores)), 128)
    block_m = max(128, min(_round_up(block_m, 128), per_core))
    num_tiles = pl.cdiv(B, block_m)

    # Weights/biases are tiny (~10 KB): full blocks with constant index maps
    # stay resident in VMEM across all grid steps.
    full = lambda a: pl.BlockSpec(a.shape, lambda i: (0, 0))

    weight_bytes = sum(int(a.size) * a.dtype.itemsize
                       for a in (w1, b1, w2, b2, w3, b3))
    cost = pl.CostEstimate(
        flops=2 * B * (D0 * D1 + D1 * D2 + D2),
        transcendentals=B,  # one exp per row (sigmoid)
        bytes_accessed=int(x.size) * x.dtype.itemsize + B * 4 + weight_bytes,
    )

    out = pl.pallas_call(
        _mlp_kernel,
        out_shape=jax.ShapeDtypeStruct((B, 1), jnp.float32),
        grid=(num_tiles,),
        in_specs=[
            pl.BlockSpec((block_m, D0), lambda i: (i, 0)),  # x batch tile
            full(w1), full(b1),
            full(w2), full(b2),
            full(w3), full(b3),
        ],
        out_specs=pl.BlockSpec((block_m, 1), lambda i: (i, 0)),
        compiler_params=pltpu.CompilerParams(
            dimension_semantics=("parallel",),
            vmem_limit_bytes=vmem_limit_bytes,
        ),
        cost_estimate=cost,
    )(x, w1, b1, w2, b2, w3, b3)

    return out


def init_params(key, sizes):
    """PyTorch-Linear-style init: U(-1/sqrt(fan_in), +1/sqrt(fan_in))."""
    params = {}
    ks = jax.random.split(key, 2 * (len(sizes) - 1))
    for j in range(len(sizes) - 1):
        fan_in, fan_out = sizes[j], sizes[j + 1]
        bound = 1.0 / (fan_in ** 0.5)
        params[f"w{j + 1}"] = jax.random.uniform(
            ks[2 * j], (fan_in, fan_out), minval=-bound, maxval=bound,
            dtype=jnp.float32)
        params[f"b{j + 1}"] = jax.random.uniform(
            ks[2 * j + 1], (1, fan_out), minval=-bound, maxval=bound,
            dtype=jnp.float32)
    return params


def reference_forward(x, params):
    """Plain-JAX reference (HIGHEST-precision f32 dots) for verification."""
    hp = jax.lax.Precision.HIGHEST
    h = jnp.dot(x, params["w1"], precision=hp) + params["b1"]
    h = jnp.where(h > 0, h, LEAKY_SLOPE * h)
    h = jnp.dot(h, params["w2"], precision=hp) + params["b2"]
    h = jnp.where(h > 0, h, LEAKY_SLOPE * h)
    h = jnp.dot(h, params["w3"], precision=hp) + params["b3"]
    return jax.nn.sigmoid(h)


if __name__ == "__main__":
    # Discriminator(input_size=32, hidden_size=[64, 32]) -> sizes [32, 64, 32, 1]
    input_size = 32
    hidden_size = [64, 32]
    sizes = [input_size] + hidden_size + [1]

    key = jax.random.PRNGKey(0)
    k_x, k_x2, k_p = jax.random.split(key, 3)
    params = init_params(k_p, sizes)

    # Tolerances allow for the MXU's default f32 matmul precision (bf16 passes)
    # relative to the HIGHEST-precision XLA reference; GAN-discriminator level
    # accuracy is far looser than this.
    TOL_F32 = dict(atol=1e-2, rtol=1e-2)
    TOL_BF16 = dict(atol=5e-2, rtol=5e-2)

    # Small demo batch: single ragged tile (8 valid rows of a 128-row block).
    x = jax.random.normal(k_x, (8, input_size), dtype=jnp.float32)
    out = jax.block_until_ready(discriminator_forward(x, params))
    ref = reference_forward(x, params)
    assert out.shape == (8, 1)
    assert jnp.allclose(out, ref, **TOL_F32), float(jnp.max(jnp.abs(out - ref)))

    # Multi-tile grid + ragged batch: 200 rows, block_m=128 -> 2 tiles,
    # second tile ragged (no jnp.pad copy; masked last block).
    x2 = jax.random.normal(k_x2, (200, input_size), dtype=jnp.float32)
    out2 = jax.block_until_ready(discriminator_forward(x2, params, block_m=128))
    ref2 = reference_forward(x2, params)
    assert out2.shape == (200, 1)
    assert jnp.allclose(out2, ref2, **TOL_F32), float(jnp.max(jnp.abs(out2 - ref2)))

    # v7x-style split: cap block_m so both TensorCores get a tile.
    out2b = jax.block_until_ready(
        discriminator_forward(x2, params, num_cores=2))
    assert out2b.shape == (200, 1)
    assert jnp.allclose(out2b, ref2, **TOL_F32)

    # bf16 matmul-operand path: weights pre-cast (tiny), x cast in-kernel
    # (no extra HBM pass), f32 accumulation.
    out_bf16 = jax.block_until_ready(
        discriminator_forward(x2, params, compute_dtype=jnp.bfloat16))
    assert jnp.allclose(out_bf16, ref2, **TOL_BF16)

    print("KERNEL_OK")
</pallas_src>

<mosaic_0001>
module attributes {stable_mosaic.version = 11 : i64} {
  func.func @_mlp_kernel(%arg0: i32, %arg1: memref<128x32xf32, #tpu.memory_space<vmem>>, %arg2: memref<32x64xf32, #tpu.memory_space<vmem>>, %arg3: memref<1x64xf32, #tpu.memory_space<vmem>>, %arg4: memref<64x32xf32, #tpu.memory_space<vmem>>, %arg5: memref<1x32xf32, #tpu.memory_space<vmem>>, %arg6: memref<32x1xf32, #tpu.memory_space<vmem>>, %arg7: memref<1x1xf32, #tpu.memory_space<vmem>>, %arg8: memref<128x1xf32, #tpu.memory_space<vmem>>) attributes {dimension_semantics = [#tpu.dimension_semantics<parallel>], iteration_bounds = array<i64: 1>, scalar_prefetch = 0 : i64, scratch_operands = 0 : i64, tpu.core_type = #tpu.core_type<tc>, window_params = [{transform_indices = @transform_0, window_bounds = array<i64: 128, 32>}, {pipeline_mode = #tpu.pipeline_mode<synchronous>, transform_indices = @transform_1, window_bounds = array<i64: 32, 64>}, {pipeline_mode = #tpu.pipeline_mode<synchronous>, transform_indices = @transform_2, window_bounds = array<i64: 1, 64>}, {pipeline_mode = #tpu.pipeline_mode<synchronous>, transform_indices = @transform_3, window_bounds = array<i64: 64, 32>}, {pipeline_mode = #tpu.pipeline_mode<synchronous>, transform_indices = @transform_4, window_bounds = array<i64: 1, 32>}, {pipeline_mode = #tpu.pipeline_mode<synchronous>, transform_indices = @transform_5, window_bounds = array<i64: 32, 1>}, {pipeline_mode = #tpu.pipeline_mode<synchronous>, transform_indices = @transform_6, window_bounds = array<i64: 1, 1>}, {transform_indices = @transform_7, window_bounds = array<i64: 128, 1>}]} {
    %c0 = arith.constant 0 : index
    %c0_0 = arith.constant 0 : index
    %0 = vector.load %arg1[%c0, %c0_0] : memref<128x32xf32, #tpu.memory_space<vmem>>, vector<128x32xf32>
    %c0_1 = arith.constant 0 : index
    %c0_2 = arith.constant 0 : index
    %1 = vector.load %arg2[%c0_1, %c0_2] : memref<32x64xf32, #tpu.memory_space<vmem>>, vector<32x64xf32>
    %cst = arith.constant dense<0.000000e+00> : vector<128x64xf32>
    %2 = tpu.matmul %0, %1, %cst {dimension_numbers = #tpu.dot_dimension_numbers<[1], [0], [0], [1], [0, 0, 1, 1], [], []>} : vector<128x32xf32>, vector<32x64xf32>, vector<128x64xf32> -> vector<128x64xf32>
    %c0_3 = arith.constant 0 : index
    %c0_4 = arith.constant 0 : index
    %3 = vector.load %arg3[%c0_3, %c0_4] : memref<1x64xf32, #tpu.memory_space<vmem>>, vector<1x64xf32>
    %4 = vector.broadcast %3 : vector<1x64xf32> to vector<128x64xf32>
    %5 = arith.addf %2, %4 : vector<128x64xf32>
    %cst_5 = arith.constant 0.00999999977 : f32
    %6 = vector.broadcast %cst_5 : f32 to vector<128x64xf32>
    %7 = arith.mulf %6, %5 : vector<128x64xf32>
    %8 = arith.maximumf %5, %7 : vector<128x64xf32>
    %c0_6 = arith.constant 0 : index
    %c0_7 = arith.constant 0 : index
    %9 = vector.load %arg4[%c0_6, %c0_7] : memref<64x32xf32, #tpu.memory_space<vmem>>, vector<64x32xf32>
    %cst_8 = arith.constant dense<0.000000e+00> : vector<128x32xf32>
    %10 = tpu.matmul %8, %9, %cst_8 {dimension_numbers = #tpu.dot_dimension_numbers<[1], [0], [0], [1], [0, 0, 1, 1], [], []>} : vector<128x64xf32>, vector<64x32xf32>, vector<128x32xf32> -> vector<128x32xf32>
    %c0_9 = arith.constant 0 : index
    %c0_10 = arith.constant 0 : index
    %11 = vector.load %arg5[%c0_9, %c0_10] : memref<1x32xf32, #tpu.memory_space<vmem>>, vector<1x32xf32>
    %12 = vector.broadcast %11 : vector<1x32xf32> to vector<128x32xf32>
    %13 = arith.addf %10, %12 : vector<128x32xf32>
    %cst_11 = arith.constant 0.00999999977 : f32
    %14 = vector.broadcast %cst_11 : f32 to vector<128x32xf32>
    %15 = arith.mulf %14, %13 : vector<128x32xf32>
    %16 = arith.maximumf %13, %15 : vector<128x32xf32>
    %c0_12 = arith.constant 0 : index
    %c0_13 = arith.constant 0 : index
    %17 = vector.load %arg6[%c0_12, %c0_13] : memref<32x1xf32, #tpu.memory_space<vmem>>, vector<32x1xf32>
    %cst_14 = arith.constant dense<0.000000e+00> : vector<128x1xf32>
    %18 = tpu.matmul %16, %17, %cst_14 {dimension_numbers = #tpu.dot_dimension_numbers<[1], [0], [0], [1], [0, 0, 1, 1], [], []>} : vector<128x32xf32>, vector<32x1xf32>, vector<128x1xf32> -> vector<128x1xf32>
    %c0_15 = arith.constant 0 : index
    %c0_16 = arith.constant 0 : index
    %19 = vector.load %arg7[%c0_15, %c0_16] : memref<1x1xf32, #tpu.memory_space<vmem>>, vector<1x1xf32>
    %20 = vector.broadcast %19 : vector<1x1xf32> to vector<128x1xf32>
    %21 = arith.addf %18, %20 : vector<128x1xf32>
    %cst_17 = arith.constant 0.000000e+00 : f32
    %22 = vector.broadcast %cst_17 : f32 to vector<128x1xf32>
    %23 = arith.subf %22, %21 : vector<128x1xf32>
    %24 = math.exp %23 : vector<128x1xf32>
    %cst_18 = arith.constant 1.000000e+00 : f32
    %25 = vector.broadcast %cst_18 : f32 to vector<128x1xf32>
    %26 = arith.addf %25, %24 : vector<128x1xf32>
    %cst_19 = arith.constant 1.000000e+00 : f32
    %27 = vector.broadcast %cst_19 : f32 to vector<128x1xf32>
    %28 = arith.divf %27, %26 : vector<128x1xf32>
    %c0_20 = arith.constant 0 : index
    %c0_21 = arith.constant 0 : index
    %29 = vector.load %arg8[%c0_20, %c0_21] : memref<128x1xf32, #tpu.memory_space<vmem>>, vector<128x1xf32>
    tpu.vector_store %arg8[%c0_20, %c0_21], %28 {strides = array<i32>} : memref<128x1xf32, #tpu.memory_space<vmem>>, vector<128x1xf32>,
    return
  }
  func.func @transform_0(%arg0: i32) -> (i32, i32) {
    %c0_i32 = arith.constant 0 : i32
    %c0_i32_0 = arith.constant 0 : i32
    return %arg0, %c0_i32 : i32, i32
  }
  func.func @transform_1(%arg0: i32) -> (i32, i32) {
    %c0_i32 = arith.constant 0 : i32
    %c0_i32_0 = arith.constant 0 : i32
    %c0_i32_1 = arith.constant 0 : i32
    return %c0_i32, %c0_i32_0 : i32, i32
  }
  func.func @transform_2(%arg0: i32) -> (i32, i32) {
    %c0_i32 = arith.constant 0 : i32
    %c0_i32_0 = arith.constant 0 : i32
    %c0_i32_1 = arith.constant 0 : i32
    return %c0_i32, %c0_i32_0 : i32, i32
  }
  func.func @transform_3(%arg0: i32) -> (i32, i32) {
    %c0_i32 = arith.constant 0 : i32
    %c0_i32_0 = arith.constant 0 : i32
    %c0_i32_1 = arith.constant 0 : i32
    return %c0_i32, %c0_i32_0 : i32, i32
  }
  func.func @transform_4(%arg0: i32) -> (i32, i32) {
    %c0_i32 = arith.constant 0 : i32
    %c0_i32_0 = arith.constant 0 : i32
    %c0_i32_1 = arith.constant 0 : i32
    return %c0_i32, %c0_i32_0 : i32, i32
  }
  func.func @transform_5(%arg0: i32) -> (i32, i32) {
    %c0_i32 = arith.constant 0 : i32
    %c0_i32_0 = arith.constant 0 : i32
    %c0_i32_1 = arith.constant 0 : i32
    return %c0_i32, %c0_i32_0 : i32, i32
  }
  func.func @transform_6(%arg0: i32) -> (i32, i32) {
    %c0_i32 = arith.constant 0 : i32
    %c0_i32_0 = arith.constant 0 : i32
    %c0_i32_1 = arith.constant 0 : i32
    return %c0_i32, %c0_i32_0 : i32, i32
  }
  func.func @transform_7(%arg0: i32) -> (i32, i32) {
    %c0_i32 = arith.constant 0 : i32
    %c0_i32_0 = arith.constant 0 : i32
    return %arg0, %c0_i32 : i32, i32
  }
}

</mosaic_0001>

<llo_original>
// kernel: tpu_custom_call.1
$region0: #{tpu_custom_call.1}
  #allocation0 [shape = 'u32[]', space=smem, size = 0x4, offset = 0x4, fixed_abs, tag = 'smem constant byte address 0x4 - core index']
  #allocation1 [shape = 'u32[144,128]{1,0:T(1,128)}', space=vmem, size = 0x12000, scoped, tag = 'internal scratch']
  #allocation2 [shape = 'f32[1,1]{1,0:T(1,128)S(1)}', space=vmem, size = 0x200, scoped, tag = 'scoped memory for tpu_custom_call.1']
  %s0 = inlined_call_operand.vmem [shape: f32[8,32], index: 0, kind: input, shape index: {}]
  %s1 = inlined_call_operand.vmem [shape: f32[32,64], index: 1, kind: input, shape index: {}]
  %s2 = inlined_call_operand.vmem [shape: f32[1,64], index: 2, kind: input, shape index: {}]
  %s3 = inlined_call_operand.vmem [shape: f32[64,32], index: 3, kind: input, shape index: {}]
  %s4 = inlined_call_operand.vmem [shape: f32[1,32], index: 4, kind: input, shape index: {}]
  %s5 = inlined_call_operand.vmem [shape: f32[32,1], index: 5, kind: input, shape index: {}]
  %s6 = inlined_call_operand.<no memory space> [shape: f32[1,1], index: 6, kind: input, shape index: {}]
  %s7 = inlined_call_operand.vmem [shape: f32[8,1], index: 7, kind: output, shape index: {}]
  %s8 = sld [smem:[#allocation0]]
  $region72: #{tpu_custom_call.1} parent=0
    _
  %s10 = ssub.s32 1, %s8
  %s11 = scalar_select 0, %s10, %s8
  %v12 = vstv %s6
  %13 = vst [vmem:[#allocation2] sm:$0x1] %v12
  $region1: #{tpu_custom_call.1} parent=0
    #allocation3 [shape = 'u8[65536]{0}', space=vmem, size = 0x10000, scoped, tag = 'output window, operand 0, single buffered']
    // Predicated region
    $region2: #{tpu_custom_call.1} parent=1 // pred_check
      _
    $region3: #{tpu_custom_call.1} parent=1 // pred_check_branch
      %15 = sbr.rel (0) target = $region5
    $region4: #{tpu_custom_call.1} parent=1 // pred_region
      _
    $region5: #{tpu_custom_call.1} parent=1 // pred_fallthru
      _
    // Predicated region
    $region6: #{tpu_custom_call.1} parent=1 // pred_check
      _
    $region7: #{tpu_custom_call.1} parent=1 // pred_check_branch
      %17 = sbr.rel (0) target = $region9
    $region8: #{tpu_custom_call.1} parent=1 // pred_region
      _
    $region9: #{tpu_custom_call.1} parent=1 // pred_fallthru
      _
    // Predicated region
    $region10: #{tpu_custom_call.1} parent=1 // pred_check
      _
    $region11: #{tpu_custom_call.1} parent=1 // pred_check_branch
      %19 = sbr.rel (0) target = $region13
    $region12: #{tpu_custom_call.1} parent=1 // pred_region
      _
    $region13: #{tpu_custom_call.1} parent=1 // pred_fallthru
      _
    // Predicated region
    $region14: #{tpu_custom_call.1} parent=1 // pred_check
      _
    $region15: #{tpu_custom_call.1} parent=1 // pred_check_branch
      %21 = sbr.rel (0) target = $region17
    $region16: #{tpu_custom_call.1} parent=1 // pred_region
      _
    $region17: #{tpu_custom_call.1} parent=1 // pred_fallthru
      _
    // Predicated region
    $region18: #{tpu_custom_call.1} parent=1 // pred_check
      _
    $region19: #{tpu_custom_call.1} parent=1 // pred_check_branch
      %23 = sbr.rel (0) target = $region21
    $region20: #{tpu_custom_call.1} parent=1 // pred_region
      _
    $region21: #{tpu_custom_call.1} parent=1 // pred_fallthru
      _
    // Predicated region
    $region22: #{tpu_custom_call.1} parent=1 // pred_check
      _
    $region23: #{tpu_custom_call.1} parent=1 // pred_check_branch
      %25 = sbr.rel (0) target = $region25
    $region24: #{tpu_custom_call.1} parent=1 // pred_region
      _
    $region25: #{tpu_custom_call.1} parent=1 // pred_fallthru
      _
    // Predicated region
    $region26: #{tpu_custom_call.1} parent=1 // pred_check
      _
    $region27: #{tpu_custom_call.1} parent=1 // pred_check_branch
      %27 = sbr.rel (0) target = $region29
    $region28: #{tpu_custom_call.1} parent=1 // pred_region
      _
    $region29: #{tpu_custom_call.1} parent=1 // pred_fallthru
      _
    %v28 = vld [vmem:[%s0] sm:$0xff]
    %v29 = vld [vmem:[%s0 + $0x8] sm:$0xff]
    %v30 = vld [vmem:[%s0 + $0x10] sm:$0xff]
    %v31 = vld [vmem:[%s0 + $0x18] sm:$0xff]
    %v32 = vld [vmem:[%s0 + $0x20] sm:$0xff]
    %v33 = vld [vmem:[%s0 + $0x28] sm:$0xff]
    %v34 = vld [vmem:[%s0 + $0x30] sm:$0xff]
    %v35 = vld [vmem:[%s0 + $0x38] sm:$0xff]
    %v36 = vld [vmem:[%s0 + $0x40] sm:$0xff]
    %v37 = vld [vmem:[%s0 + $0x48] sm:$0xff]
    %v38 = vld [vmem:[%s0 + $0x50] sm:$0xff]
    %v39 = vld [vmem:[%s0 + $0x58] sm:$0xff]
    %v40 = vld [vmem:[%s0 + $0x60] sm:$0xff]
    %v41 = vld [vmem:[%s0 + $0x68] sm:$0xff]
    %v42 = vld [vmem:[%s0 + $0x70] sm:$0xff]
    %v43 = vld [vmem:[%s0 + $0x78] sm:$0xff]
    %v44 = vld [vmem:[%s1] sm:$0xff]
    %v45 = vld [vmem:[%s1 + $0x8] sm:$0xff]
    %v46 = vld [vmem:[%s1 + $0x10] sm:$0xff]
    %v47 = vld [vmem:[%s1 + $0x18] sm:$0xff]
    %v48 = vld [vmem:[%s2] sm:$0x1]
    %v50 = vlaneseq
    %v51 = vshrl.u32 %v50, 7
    %v52 = vsub.s32 0, %v51
    %v53 = vrot.slane %v48, %v52
    %vm55 = vcmask 261120
    %v57 = vsel %vm55, %v28, 0
    %v60 = vsel %vm55, %v29, 0
    %v63 = vsel %vm55, %v30, 0
    %v66 = vsel %vm55, %v31, 0
    %v69 = vsel %vm55, %v32, 0
    %v72 = vsel %vm55, %v33, 0
    %v75 = vsel %vm55, %v34, 0
    %v78 = vsel %vm55, %v35, 0
    %v81 = vsel %vm55, %v36, 0
    %v84 = vsel %vm55, %v37, 0
    %v87 = vsel %vm55, %v38, 0
    %v90 = vsel %vm55, %v39, 0
    %v93 = vsel %vm55, %v40, 0
    %v96 = vsel %vm55, %v41, 0
    %v99 = vsel %vm55, %v42, 0
    %v102 = vsel %vm55, %v43, 0
    %104 = vmatprep.subr.mxu0 0.0
    %105 = vmatpush1.msra.mxu0 %v44
    %106 = vmatprep.subr.mxu0 0.0
    %107 = vmatpush1.msra.mxu0 %v45
    %108 = vmatprep.subr.mxu0 0.0
    %109 = vmatpush1.msra.mxu0 %v46
    %110 = vmatprep.subr.mxu0 0.0
    %111 = vmatpush1.msra.mxu0 %v47
    %112 = vmatprep.subr.mxu0 0.0
    %113 = vmatpush1.msra.mxu0 0.0
    %114 = vmatprep.subr.mxu0 0.0
    %115 = vmatpush1.msra.mxu0 0.0
    %116 = vmatprep.subr.mxu0 0.0
    %117 = vmatpush1.msra.mxu0 0.0
    %118 = vmatprep.subr.mxu0 0.0
    %119 = vmatpush1.msra.mxu0 0.0
    %120 = vmatprep.subr.mxu0 0.0
    %121 = vmatpush1.msra.mxu0 0.0
    %122 = vmatprep.subr.mxu0 0.0
    %123 = vmatpush1.msra.mxu0 0.0
    %124 = vmatprep.subr.mxu0 0.0
    %125 = vmatpush1.msra.mxu0 0.0
    %126 = vmatprep.subr.mxu0 0.0
    %127 = vmatpush1.msra.mxu0 0.0
    %128 = vmatprep.subr.mxu0 0.0
    %129 = vmatpush1.msra.mxu0 0.0
    %130 = vmatprep.subr.mxu0 0.0
    %131 = vmatpush1.msra.mxu0 0.0
    %132 = vmatprep.subr.mxu0 0.0
    %133 = vmatpush1.msra.mxu0 0.0
    %134 = vmatprep.subr.mxu0 0.0
    %135 = vmatpush1.msra.mxu0 0.0
    %136 = vmatprep.subr.mxu0 0.0
    %137 = vmatpush1.msra.mxu0 0.0
    %138 = vmatprep.subr.mxu0 0.0
    %139 = vmatpush1.msra.mxu0 0.0
    %140 = vmatprep.subr.mxu0 0.0
    %141 = vmatpush1.msra.mxu0 0.0
    %142 = vmatprep.subr.mxu0 0.0
    %143 = vmatpush1.msra.mxu0 0.0
    %144 = vmatprep.subr.mxu0 0.0
    %145 = vmatpush1.msra.mxu0 0.0
    %146 = vmatprep.subr.mxu0 0.0
    %147 = vmatpush1.msra.mxu0 0.0
    %148 = vmatprep.subr.mxu0 0.0
    %149 = vmatpush1.msra.mxu0 0.0
    %150 = vmatprep.subr.mxu0 0.0
    %151 = vmatpush1.msra.mxu0 0.0
    %152 = vmatprep.subr.mxu0 0.0
    %153 = vmatpush1.msra.mxu0 0.0
    %154 = vmatprep.subr.mxu0 0.0
    %155 = vmatpush1.msra.mxu0 0.0
    %156 = vmatprep.subr.mxu0 0.0
    %157 = vmatpush1.msra.mxu0 0.0
    %158 = vmatprep.subr.mxu0 0.0
    %159 = vmatpush1.msra.mxu0 0.0
    %160 = vmatprep.subr.mxu0 0.0
    %161 = vmatpush1.msra.mxu0 0.0
    %162 = vmatprep.subr.mxu0 0.0
    %163 = vmatpush1.msra.mxu0 0.0
    %164 = vmatprep.subr.mxu0 0.0
    %165 = vmatpush1.msra.mxu0 0.0
    %166 = vmatprep.subr.mxu0 0.0
    %167 = vmatpush1.msra.mxu0 0.0
    %168 = vmatprep.mubr.f32.mxu0 0.0
    %169 = vmatmul.mubr.f32.gmra.mrb[0].mxu0 %v57
    %v170 = vpop.f32.mrb[0].mxu0
    %v171 = vadd.f32 %v53, %v170
    %v172 = vpop.f32.mrb[0].mxu0
    %173 = vmatprep.mubr.f32.mxu0 0.0
    %174 = vmatmul.mubr.f32.gmra.mrb[0].mxu0 %v60
    %v175 = vpop.f32.mrb[0].mxu0
    %v176 = vadd.f32 %v53, %v175
    %v177 = vpop.f32.mrb[0].mxu0
    %178 = vmatprep.mubr.f32.mxu0 0.0
    %179 = vmatmul.mubr.f32.gmra.mrb[0].mxu0 %v63
    %v180 = vpop.f32.mrb[0].mxu0
    %v181 = vadd.f32 %v53, %v180
    %v182 = vpop.f32.mrb[0].mxu0
    %183 = vmatprep.mubr.f32.mxu0 0.0
    %184 = vmatmul.mubr.f32.gmra.mrb[0].mxu0 %v66
    %v185 = vpop.f32.mrb[0].mxu0
    %v186 = vadd.f32 %v53, %v185
    %v187 = vpop.f32.mrb[0].mxu0
    %188 = vmatprep.mubr.f32.mxu0 0.0
    %189 = vmatmul.mubr.f32.gmra.mrb[0].mxu0 %v69
    %v190 = vpop.f32.mrb[0].mxu0
    %v191 = vadd.f32 %v53, %v190
    %v192 = vpop.f32.mrb[0].mxu0
    %193 = vmatprep.mubr.f32.mxu0 0.0
    %194 = vmatmul.mubr.f32.gmra.mrb[0].mxu0 %v72
    %v195 = vpop.f32.mrb[0].mxu0
    %v196 = vadd.f32 %v53, %v195
    %v197 = vpop.f32.mrb[0].mxu0
    %198 = vmatprep.mubr.f32.mxu0 0.0
    %199 = vmatmul.mubr.f32.gmra.mrb[0].mxu0 %v75
    %v200 = vpop.f32.mrb[0].mxu0
    %v201 = vadd.f32 %v53, %v200
    %v202 = vpop.f32.mrb[0].mxu0
    %203 = vmatprep.mubr.f32.mxu0 0.0
    %204 = vmatmul.mubr.f32.gmra.mrb[0].mxu0 %v78
    %v205 = vpop.f32.mrb[0].mxu0
    %v206 = vadd.f32 %v53, %v205
    %v207 = vpop.f32.mrb[0].mxu0
    %208 = vmatprep.mubr.f32.mxu0 0.0
    %209 = vmatmul.mubr.f32.gmra.mrb[0].mxu0 %v81
    %v210 = vpop.f32.mrb[0].mxu0
    %v211 = vadd.f32 %v53, %v210
    %v212 = vpop.f32.mrb[0].mxu0
    %213 = vmatprep.mubr.f32.mxu0 0.0
    %214 = vmatmul.mubr.f32.gmra.mrb[0].mxu0 %v84
    %v215 = vpop.f32.mrb[0].mxu0
    %v216 = vadd.f32 %v53, %v215
    %v217 = vpop.f32.mrb[0].mxu0
    %218 = vmatprep.mubr.f32.mxu0 0.0
    %219 = vmatmul.mubr.f32.gmra.mrb[0].mxu0 %v87
    %v220 = vpop.f32.mrb[0].mxu0
    %v221 = vadd.f32 %v53, %v220
    %v222 = vpop.f32.mrb[0].mxu0
    %223 = vmatprep.mubr.f32.mxu0 0.0
    %224 = vmatmul.mubr.f32.gmra.mrb[0].mxu0 %v90
    %v225 = vpop.f32.mrb[0].mxu0
    %v226 = vadd.f32 %v53, %v225
    %v227 = vpop.f32.mrb[0].mxu0
    %228 = vmatprep.mubr.f32.mxu0 0.0
    %229 = vmatmul.mubr.f32.gmra.mrb[0].mxu0 %v93
    %v230 = vpop.f32.mrb[0].mxu0
    %v231 = vadd.f32 %v53, %v230
    %v232 = vpop.f32.mrb[0].mxu0
    %233 = vmatprep.mubr.f32.mxu0 0.0
    %234 = vmatmul.mubr.f32.gmra.mrb[0].mxu0 %v96
    %v235 = vpop.f32.mrb[0].mxu0
    %v236 = vadd.f32 %v53, %v235
    %v237 = vpop.f32.mrb[0].mxu0
    %238 = vmatprep.mubr.f32.mxu0 0.0
    %239 = vmatmul.mubr.f32.gmra.mrb[0].mxu0 %v99
    %v240 = vpop.f32.mrb[0].mxu0
    %v241 = vadd.f32 %v53, %v240
    %v242 = vpop.f32.mrb[0].mxu0
    %243 = vmatprep.mubr.f32.mxu0 0.0
    %244 = vmatmul.mubr.f32.gmra.mrb[0].mxu0 %v102
    %v245 = vpop.f32.mrb[0].mxu0
    %v246 = vadd.f32 %v53, %v245
    %v247 = vpop.f32.mrb[0].mxu0
    %248 = vdwg.mxu0
    %v249 = vmul.f32 %v171, 0.01
    %v250 = vmul.f32 %v176, 0.01
    %v251 = vmul.f32 %v181, 0.01
    %v252 = vmul.f32 %v186, 0.01
    %v253 = vmul.f32 %v191, 0.01
    %v254 = vmul.f32 %v196, 0.01
    %v255 = vmul.f32 %v201, 0.01
    %v256 = vmul.f32 %v206, 0.01
    %v257 = vmul.f32 %v211, 0.01
    %v258 = vmul.f32 %v216, 0.01
    %v259 = vmul.f32 %v221, 0.01
    %v260 = vmul.f32 %v226, 0.01
    %v261 = vmul.f32 %v231, 0.01
    %v262 = vmul.f32 %v236, 0.01
    %v263 = vmul.f32 %v241, 0.01
    %v264 = vmul.f32 %v246, 0.01
    %v265 = vmax.f32 %v171, %v249
    %v266 = vmax.f32 %v176, %v250
    %v267 = vmax.f32 %v181, %v251
    %v268 = vmax.f32 %v186, %v252
    %v269 = vmax.f32 %v191, %v253
    %v270 = vmax.f32 %v196, %v254
    %v271 = vmax.f32 %v201, %v255
    %v272 = vmax.f32 %v206, %v256
    %v273 = vmax.f32 %v211, %v257
    %v274 = vmax.f32 %v216, %v258
    %v275 = vmax.f32 %v221, %v259
    %v276 = vmax.f32 %v226, %v260
    %v277 = vmax.f32 %v231, %v261
    %v278 = vmax.f32 %v236, %v262
    %v279 = vmax.f32 %v241, %v263
    %v280 = vmax.f32 %v246, %v264
    %v281 = vld [vmem:[%s3] sm:$0xff]
    %v282 = vld [vmem:[%s3 + $0x8] sm:$0xff]
    %v283 = vld [vmem:[%s3 + $0x10] sm:$0xff]
    %v284 = vld [vmem:[%s3 + $0x18] sm:$0xff]
    %v285 = vld [vmem:[%s3 + $0x20] sm:$0xff]
    %v286 = vld [vmem:[%s3 + $0x28] sm:$0xff]
    %v287 = vld [vmem:[%s3 + $0x30] sm:$0xff]
    %v288 = vld [vmem:[%s3 + $0x38] sm:$0xff]
    %v289 = vld [vmem:[%s4] sm:$0x1]
    %v291 = vlaneseq
    %v292 = vshrl.u32 %v291, 7
    %v293 = vsub.s32 0, %v292
    %v294 = vrot.slane %v289, %v293
    %vm296 = vcmask 523264
    %v298 = vsel %vm296, %v265, 0
    %v301 = vsel %vm296, %v266, 0
    %v304 = vsel %vm296, %v267, 0
    %v307 = vsel %vm296, %v268, 0
    %v310 = vsel %vm296, %v269, 0
    %v313 = vsel %vm296, %v270, 0
    %v316 = vsel %vm296, %v271, 0
    %v319 = vsel %vm296, %v272, 0
    %v322 = vsel %vm296, %v273, 0
    %v325 = vsel %vm296, %v274, 0
    %v328 = vsel %vm296, %v275, 0
    %v331 = vsel %vm296, %v276, 0
    %v334 = vsel %vm296, %v277, 0
    %v337 = vsel %vm296, %v278, 0
    %v340 = vsel %vm296, %v279, 0
    %v343 = vsel %vm296, %v280, 0
    %345 = vmatprep.subr.mxu0 0.0
    %346 = vmatpush1.msra.mxu0 %v281
    %347 = vmatprep.subr.mxu0 0.0
    %348 = vmatpush1.msra.mxu0 %v282
    %349 = vmatprep.subr.mxu0 0.0
    %350 = vmatpush1.msra.mxu0 %v283
    %351 = vmatprep.subr.mxu0 0.0
    %352 = vmatpush1.msra.mxu0 %v284
    %353 = vmatprep.subr.mxu0 0.0
    %354 = vmatpush1.msra.mxu0 %v285
    %355 = vmatprep.subr.mxu0 0.0
    %356 = vmatpush1.msra.mxu0 %v286
    %357 = vmatprep.subr.mxu0 0.0
    %358 = vmatpush1.msra.mxu0 %v287
    %359 = vmatprep.subr.mxu0 0.0
    %360 = vmatpush1.msra.mxu0 %v288
    %361 = vmatprep.subr.mxu0 0.0
    %362 = vmatpush1.msra.mxu0 0.0
    %363 = vmatprep.subr.mxu0 0.0
    %364 = vmatpush1.msra.mxu0 0.0
    %365 = vmatprep.subr.mxu0 0.0
    %366 = vmatpush1.msra.mxu0 0.0
    %367 = vmatprep.subr.mxu0 0.0
    %368 = vmatpush1.msra.mxu0 0.0
    %369 = vmatprep.subr.mxu0 0.0
    %370 = vmatpush1.msra.mxu0 0.0
    %371 = vmatprep.subr.mxu0 0.0
    %372 = vmatpush1.msra.mxu0 0.0
    %373 = vmatprep.subr.mxu0 0.0
    %374 = vmatpush1.msra.mxu0 0.0
    %375 = vmatprep.subr.mxu0 0.0
    %376 = vmatpush1.msra.mxu0 0.0
    %377 = vmatprep.subr.mxu0 0.0
    %378 = vmatpush1.msra.mxu0 0.0
    %379 = vmatprep.subr.mxu0 0.0
    %380 = vmatpush1.msra.mxu0 0.0
    %381 = vmatprep.subr.mxu0 0.0
    %382 = vmatpush1.msra.mxu0 0.0
    %383 = vmatprep.subr.mxu0 0.0
    %384 = vmatpush1.msra.mxu0 0.0
    %385 = vmatprep.subr.mxu0 0.0
    %386 = vmatpush1.msra.mxu0 0.0
    %387 = vmatprep.subr.mxu0 0.0
    %388 = vmatpush1.msra.mxu0 0.0
    %389 = vmatprep.subr.mxu0 0.0
    %390 = vmatpush1.msra.mxu0 0.0
    %391 = vmatprep.subr.mxu0 0.0
    %392 = vmatpush1.msra.mxu0 0.0
    %393 = vmatprep.subr.mxu0 0.0
    %394 = vmatpush1.msra.mxu0 0.0
    %395 = vmatprep.subr.mxu0 0.0
    %396 = vmatpush1.msra.mxu0 0.0
    %397 = vmatprep.subr.mxu0 0.0
    %398 = vmatpush1.msra.mxu0 0.0
    %399 = vmatprep.subr.mxu0 0.0
    %400 = vmatpush1.msra.mxu0 0.0
    %401 = vmatprep.subr.mxu0 0.0
    %402 = vmatpush1.msra.mxu0 0.0
    %403 = vmatprep.subr.mxu0 0.0
    %404 = vmatpush1.msra.mxu0 0.0
    %405 = vmatprep.subr.mxu0 0.0
    %406 = vmatpush1.msra.mxu0 0.0
    %407 = vmatprep.subr.mxu0 0.0
    %408 = vmatpush1.msra.mxu0 0.0
    %409 = vmatprep.mubr.f32.mxu0 0.0
    %410 = vmatmul.mubr.f32.gmra.mrb[0].mxu0 %v298
    %v411 = vpop.f32.mrb[0].mxu0
    %v412 = vadd.f32 %v294, %v411
    %v413 = vpop.f32.mrb[0].mxu0
    %414 = vmatprep.mubr.f32.mxu0 0.0
    %415 = vmatmul.mubr.f32.gmra.mrb[0].mxu0 %v301
    %v416 = vpop.f32.mrb[0].mxu0
    %v417 = vadd.f32 %v294, %v416
    %v418 = vpop.f32.mrb[0].mxu0
    %419 = vmatprep.mubr.f32.mxu0 0.0
    %420 = vmatmul.mubr.f32.gmra.mrb[0].mxu0 %v304
    %v421 = vpop.f32.mrb[0].mxu0
    %v422 = vadd.f32 %v294, %v421
    %v423 = vpop.f32.mrb[0].mxu0
    %424 = vmatprep.mubr.f32.mxu0 0.0
    %425 = vmatmul.mubr.f32.gmra.mrb[0].mxu0 %v307
    %v426 = vpop.f32.mrb[0].mxu0
    %v427 = vadd.f32 %v294, %v426
    %v428 = vpop.f32.mrb[0].mxu0
    %429 = vmatprep.mubr.f32.mxu0 0.0
    %430 = vmatmul.mubr.f32.gmra.mrb[0].mxu0 %v310
    %v431 = vpop.f32.mrb[0].mxu0
    %v432 = vadd.f32 %v294, %v431
    %v433 = vpop.f32.mrb[0].mxu0
    %434 = vmatprep.mubr.f32.mxu0 0.0
    %435 = vmatmul.mubr.f32.gmra.mrb[0].mxu0 %v313
    %v436 = vpop.f32.mrb[0].mxu0
    %v437 = vadd.f32 %v294, %v436
    %v438 = vpop.f32.mrb[0].mxu0
    %439 = vmatprep.mubr.f32.mxu0 0.0
    %440 = vmatmul.mubr.f32.gmra.mrb[0].mxu0 %v316
    %v441 = vpop.f32.mrb[0].mxu0
    %v442 = vadd.f32 %v294, %v441
    %v443 = vpop.f32.mrb[0].mxu0
    %444 = vmatprep.mubr.f32.mxu0 0.0
    %445 = vmatmul.mubr.f32.gmra.mrb[0].mxu0 %v319
    %v446 = vpop.f32.mrb[0].mxu0
    %v447 = vadd.f32 %v294, %v446
    %v448 = vpop.f32.mrb[0].mxu0
    %449 = vmatprep.mubr.f32.mxu0 0.0
    %450 = vmatmul.mubr.f32.gmra.mrb[0].mxu0 %v322
    %v451 = vpop.f32.mrb[0].mxu0
    %v452 = vadd.f32 %v294, %v451
    %v453 = vpop.f32.mrb[0].mxu0
    %454 = vmatprep.mubr.f32.mxu0 0.0
    %455 = vmatmul.mubr.f32.gmra.mrb[0].mxu0 %v325
    %v456 = vpop.f32.mrb[0].mxu0
    %v457 = vadd.f32 %v294, %v456
    %v458 = vpop.f32.mrb[0].mxu0
    %459 = vmatprep.mubr.f32.mxu0 0.0
    %460 = vmatmul.mubr.f32.gmra.mrb[0].mxu0 %v328
    %v461 = vpop.f32.mrb[0].mxu0
    %v462 = vadd.f32 %v294, %v461
    %v463 = vpop.f32.mrb[0].mxu0
    %464 = vmatprep.mubr.f32.mxu0 0.0
    %465 = vmatmul.mubr.f32.gmra.mrb[0].mxu0 %v331
    %v466 = vpop.f32.mrb[0].mxu0
    %v467 = vadd.f32 %v294, %v466
    %v468 = vpop.f32.mrb[0].mxu0
    %469 = vmatprep.mubr.f32.mxu0 0.0
    %470 = vmatmul.mubr.f32.gmra.mrb[0].mxu0 %v334
    %v471 = vpop.f32.mrb[0].mxu0
    %v472 = vadd.f32 %v294, %v471
    %v473 = vpop.f32.mrb[0].mxu0
    %474 = vmatprep.mubr.f32.mxu0 0.0
    %475 = vmatmul.mubr.f32.gmra.mrb[0].mxu0 %v337
    %v476 = vpop.f32.mrb[0].mxu0
    %v477 = vadd.f32 %v294, %v476
    %v478 = vpop.f32.mrb[0].mxu0
    %479 = vmatprep.mubr.f32.mxu0 0.0
    %480 = vmatmul.mubr.f32.gmra.mrb[0].mxu0 %v340
    %v481 = vpop.f32.mrb[0].mxu0
    %v482 = vadd.f32 %v294, %v481
    %v483 = vpop.f32.mrb[0].mxu0
    %484 = vmatprep.mubr.f32.mxu0 0.0
    %485 = vmatmul.mubr.f32.gmra.mrb[0].mxu0 %v343
    %v486 = vpop.f32.mrb[0].mxu0
    %v487 = vadd.f32 %v294, %v486
    %v488 = vpop.f32.mrb[0].mxu0
    %489 = vdwg.mxu0
    %v490 = vmul.f32 %v412, 0.01
    %v491 = vmul.f32 %v417, 0.01
    %v492 = vmul.f32 %v422, 0.01
    %v493 = vmul.f32 %v427, 0.01
    %v494 = vmul.f32 %v432, 0.01
    %v495 = vmul.f32 %v437, 0.01
    %v496 = vmul.f32 %v442, 0.01
    %v497 = vmul.f32 %v447, 0.01
    %v498 = vmul.f32 %v452, 0.01
    %v499 = vmul.f32 %v457, 0.01
    %v500 = vmul.f32 %v462, 0.01
    %v501 = vmul.f32 %v467, 0.01
    %v502 = vmul.f32 %v472, 0.01
    %v503 = vmul.f32 %v477, 0.01
    %v504 = vmul.f32 %v482, 0.01
    %v505 = vmul.f32 %v487, 0.01
    %v506 = vmax.f32 %v412, %v490
    %v507 = vmax.f32 %v417, %v491
    %v508 = vmax.f32 %v422, %v492
    %v509 = vmax.f32 %v427, %v493
    %v510 = vmax.f32 %v432, %v494
    %v511 = vmax.f32 %v437, %v495
    %v512 = vmax.f32 %v442, %v496
    %v513 = vmax.f32 %v447, %v497
    %v514 = vmax.f32 %v452, %v498
    %v515 = vmax.f32 %v457, %v499
    %v516 = vmax.f32 %v462, %v500
    %v517 = vmax.f32 %v467, %v501
    %v518 = vmax.f32 %v472, %v502
    %v519 = vmax.f32 %v477, %v503
    %v520 = vmax.f32 %v482, %v504
    %v521 = vmax.f32 %v487, %v505
    %v522 = vld [vmem:[%s5] sm:$0xff]
    %v523 = vld [vmem:[%s5 + $0x8] sm:$0xff]
    %v524 = vld [vmem:[%s5 + $0x10] sm:$0xff]
    %v525 = vld [vmem:[%s5 + $0x18] sm:$0xff]
    %v526 = vld [vmem:[#allocation2] sm:$0x1]
    %v528 = vlaneseq
    %v529 = vshrl.u32 %v528, 7
    %v530 = vsub.s32 0, %v529
    %v531 = vrot.slane %v526, %v530
    %v534 = vsel %vm55, %v506, 0
    %v537 = vsel %vm55, %v507, 0
    %v540 = vsel %vm55, %v508, 0
    %v543 = vsel %vm55, %v509, 0
    %v546 = vsel %vm55, %v510, 0
    %v549 = vsel %vm55, %v511, 0
    %v552 = vsel %vm55, %v512, 0
    %v555 = vsel %vm55, %v513, 0
    %v558 = vsel %vm55, %v514, 0
    %v561 = vsel %vm55, %v515, 0
    %v564 = vsel %vm55, %v516, 0
    %v567 = vsel %vm55, %v517, 0
    %v570 = vsel %vm55, %v518, 0
    %v573 = vsel %vm55, %v519, 0
    %v576 = vsel %vm55, %v520, 0
    %v579 = vsel %vm55, %v521, 0
    %581 = vmatprep.subr.mxu0 0.0
    %582 = vmatpush1.msra.mxu0 %v522
    %583 = vmatprep.subr.mxu0 0.0
    %584 = vmatpush1.msra.mxu0 %v523
    %585 = vmatprep.subr.mxu0 0.0
    %586 = vmatpush1.msra.mxu0 %v524
    %587 = vmatprep.subr.mxu0 0.0
    %588 = vmatpush1.msra.mxu0 %v525
    %589 = vmatprep.subr.mxu0 0.0
    %590 = vmatpush1.msra.mxu0 0.0
    %591 = vmatprep.subr.mxu0 0.0
    %592 = vmatpush1.msra.mxu0 0.0
    %593 = vmatprep.subr.mxu0 0.0
    %594 = vmatpush1.msra.mxu0 0.0
    %595 = vmatprep.subr.mxu0 0.0
    %596 = vmatpush1.msra.mxu0 0.0
    %597 = vmatprep.subr.mxu0 0.0
    %598 = vmatpush1.msra.mxu0 0.0
    %599 = vmatprep.subr.mxu0 0.0
    %600 = vmatpush1.msra.mxu0 0.0
    %601 = vmatprep.subr.mxu0 0.0
    %602 = vmatpush1.msra.mxu0 0.0
    %603 = vmatprep.subr.mxu0 0.0
    %604 = vmatpush1.msra.mxu0 0.0
    %605 = vmatprep.subr.mxu0 0.0
    %606 = vmatpush1.msra.mxu0 0.0
    %607 = vmatprep.subr.mxu0 0.0
    %608 = vmatpush1.msra.mxu0 0.0
    %609 = vmatprep.subr.mxu0 0.0
    %610 = vmatpush1.msra.mxu0 0.0
    %611 = vmatprep.subr.mxu0 0.0
    %612 = vmatpush1.msra.mxu0 0.0
    %613 = vmatprep.subr.mxu0 0.0
    %614 = vmatpush1.msra.mxu0 0.0
    %615 = vmatprep.subr.mxu0 0.0
    %616 = vmatpush1.msra.mxu0 0.0
    %617 = vmatprep.subr.mxu0 0.0
    %618 = vmatpush1.msra.mxu0 0.0
    %619 = vmatprep.subr.mxu0 0.0
    %620 = vmatpush1.msra.mxu0 0.0
    %621 = vmatprep.subr.mxu0 0.0
    %622 = vmatpush1.msra.mxu0 0.0
    %623 = vmatprep.subr.mxu0 0.0
    %624 = vmatpush1.msra.mxu0 0.0
    %625 = vmatprep.subr.mxu0 0.0
    %626 = vmatpush1.msra.mxu0 0.0
    %627 = vmatprep.subr.mxu0 0.0
    %628 = vmatpush1.msra.mxu0 0.0
    %629 = vmatprep.subr.mxu0 0.0
    %630 = vmatpush1.msra.mxu0 0.0
    %631 = vmatprep.subr.mxu0 0.0
    %632 = vmatpush1.msra.mxu0 0.0
    %633 = vmatprep.subr.mxu0 0.0
    %634 = vmatpush1.msra.mxu0 0.0
    %635 = vmatprep.subr.mxu0 0.0
    %636 = vmatpush1.msra.mxu0 0.0
    %637 = vmatprep.subr.mxu0 0.0
    %638 = vmatpush1.msra.mxu0 0.0
    %639 = vmatprep.subr.mxu0 0.0
    %640 = vmatpush1.msra.mxu0 0.0
    %641 = vmatprep.subr.mxu0 0.0
    %642 = vmatpush1.msra.mxu0 0.0
    %643 = vmatprep.subr.mxu0 0.0
    %644 = vmatpush1.msra.mxu0 0.0
    %645 = vmatprep.mubr.f32.mxu0 0.0
    %646 = vmatmul.mubr.f32.gmra.mrb[0].mxu0 %v534
    %v647 = vpop.f32.mrb[0].mxu0
    %v648 = vadd.f32 %v531, %v647
    %v649 = vpop.f32.mrb[0].mxu0
    %650 = vmatprep.mubr.f32.mxu0 0.0
    %651 = vmatmul.mubr.f32.gmra.mrb[0].mxu0 %v537
    %v652 = vpop.f32.mrb[0].mxu0
    %v653 = vadd.f32 %v531, %v652
    %v654 = vpop.f32.mrb[0].mxu0
    %655 = vmatprep.mubr.f32.mxu0 0.0
    %656 = vmatmul.mubr.f32.gmra.mrb[0].mxu0 %v540
    %v657 = vpop.f32.mrb[0].mxu0
    %v658 = vadd.f32 %v531, %v657
    %v659 = vpop.f32.mrb[0].mxu0
    %660 = vmatprep.mubr.f32.mxu0 0.0
    %661 = vmatmul.mubr.f32.gmra.mrb[0].mxu0 %v543
    %v662 = vpop.f32.mrb[0].mxu0
    %v663 = vadd.f32 %v531, %v662
    %v664 = vpop.f32.mrb[0].mxu0
    %665 = vmatprep.mubr.f32.mxu0 0.0
    %666 = vmatmul.mubr.f32.gmra.mrb[0].mxu0 %v546
    %v667 = vpop.f32.mrb[0].mxu0
    %v668 = vadd.f32 %v531, %v667
    %v669 = vpop.f32.mrb[0].mxu0
    %670 = vmatprep.mubr.f32.mxu0 0.0
    %671 = vmatmul.mubr.f32.gmra.mrb[0].mxu0 %v549
    %v672 = vpop.f32.mrb[0].mxu0
    %v673 = vadd.f32 %v531, %v672
    %v674 = vpop.f32.mrb[0].mxu0
    %675 = vmatprep.mubr.f32.mxu0 0.0
    %676 = vmatmul.mubr.f32.gmra.mrb[0].mxu0 %v552
    %v677 = vpop.f32.mrb[0].mxu0
    %v678 = vadd.f32 %v531, %v677
    %v679 = vpop.f32.mrb[0].mxu0
    %680 = vmatprep.mubr.f32.mxu0 0.0
    %681 = vmatmul.mubr.f32.gmra.mrb[0].mxu0 %v555
    %v682 = vpop.f32.mrb[0].mxu0
    %v683 = vadd.f32 %v531, %v682
    %v684 = vpop.f32.mrb[0].mxu0
    %685 = vmatprep.mubr.f32.mxu0 0.0
    %686 = vmatmul.mubr.f32.gmra.mrb[0].mxu0 %v558
    %v687 = vpop.f32.mrb[0].mxu0
    %v688 = vadd.f32 %v531, %v687
    %v689 = vpop.f32.mrb[0].mxu0
    %690 = vmatprep.mubr.f32.mxu0 0.0
    %691 = vmatmul.mubr.f32.gmra.mrb[0].mxu0 %v561
    %v692 = vpop.f32.mrb[0].mxu0
    %v693 = vadd.f32 %v531, %v692
    %v694 = vpop.f32.mrb[0].mxu0
    %695 = vmatprep.mubr.f32.mxu0 0.0
    %696 = vmatmul.mubr.f32.gmra.mrb[0].mxu0 %v564
    %v697 = vpop.f32.mrb[0].mxu0
    %v698 = vadd.f32 %v531, %v697
    %v699 = vpop.f32.mrb[0].mxu0
    %700 = vmatprep.mubr.f32.mxu0 0.0
    %701 = vmatmul.mubr.f32.gmra.mrb[0].mxu0 %v567
    %v702 = vpop.f32.mrb[0].mxu0
    %v703 = vadd.f32 %v531, %v702
    %v704 = vpop.f32.mrb[0].mxu0
    %705 = vmatprep.mubr.f32.mxu0 0.0
    %706 = vmatmul.mubr.f32.gmra.mrb[0].mxu0 %v570
    %v707 = vpop.f32.mrb[0].mxu0
    %v708 = vadd.f32 %v531, %v707
    %v709 = vpop.f32.mrb[0].mxu0
    %710 = vmatprep.mubr.f32.mxu0 0.0
    %711 = vmatmul.mubr.f32.gmra.mrb[0].mxu0 %v573
    %v712 = vpop.f32.mrb[0].mxu0
    %v713 = vadd.f32 %v531, %v712
    %v714 = vpop.f32.mrb[0].mxu0
    %715 = vmatprep.mubr.f32.mxu0 0.0
    %716 = vmatmul.mubr.f32.gmra.mrb[0].mxu0 %v576
    %v717 = vpop.f32.mrb[0].mxu0
    %v718 = vadd.f32 %v531, %v717
    %v719 = vpop.f32.mrb[0].mxu0
    %720 = vmatprep.mubr.f32.mxu0 0.0
    %721 = vmatmul.mubr.f32.gmra.mrb[0].mxu0 %v579
    %v722 = vpop.f32.mrb[0].mxu0
    %v723 = vadd.f32 %v531, %v722
    %v724 = vpop.f32.mrb[0].mxu0
    %725 = vdwg.mxu0
    %v726 = vsub.f32 0.0, %v648
    %v727 = vsub.f32 0.0, %v653
    %v728 = vsub.f32 0.0, %v658
    %v729 = vsub.f32 0.0, %v663
    %v730 = vsub.f32 0.0, %v668
    %v731 = vsub.f32 0.0, %v673
    %v732 = vsub.f32 0.0, %v678
    %v733 = vsub.f32 0.0, %v683
    %v734 = vsub.f32 0.0, %v688
    %v735 = vsub.f32 0.0, %v693
    %v736 = vsub.f32 0.0, %v698
    %v737 = vsub.f32 0.0, %v703
    %v738 = vsub.f32 0.0, %v708
    %v739 = vsub.f32 0.0, %v713
    %v740 = vsub.f32 0.0, %v718
    %v741 = vsub.f32 0.0, %v723
    %v742 = vmul.f32 %v726, 1.442695
    %v743 = vpow.pop %v742
    %v744 = vmul.f32 %v727, 1.442695
    %v745 = vpow.pop %v744
    %v746 = vmul.f32 %v728, 1.442695
    %v747 = vpow.pop %v746
    %v748 = vmul.f32 %v729, 1.442695
    %v749 = vpow.pop %v748
    %v750 = vmul.f32 %v730, 1.442695
    %v751 = vpow.pop %v750
    %v752 = vmul.f32 %v731, 1.442695
    %v753 = vpow.pop %v752
    %v754 = vmul.f32 %v732, 1.442695
    %v755 = vpow.pop %v754
    %v756 = vmul.f32 %v733, 1.442695
    %v757 = vpow.pop %v756
    %v758 = vmul.f32 %v734, 1.442695
    %v759 = vpow.pop %v758
    %v760 = vmul.f32 %v735, 1.442695
    %v761 = vpow.pop %v760
    %v762 = vmul.f32 %v736, 1.442695
    %v763 = vpow.pop %v762
    %v764 = vmul.f32 %v737, 1.442695
    %v765 = vpow.pop %v764
    %v766 = vmul.f32 %v738, 1.442695
    %v767 = vpow.pop %v766
    %v768 = vmul.f32 %v739, 1.442695
    %v769 = vpow.pop %v768
    %v770 = vmul.f32 %v740, 1.442695
    %v771 = vpow.pop %v770
    %v772 = vmul.f32 %v741, 1.442695
    %v773 = vpow.pop %v772
    %v774 = vadd.f32 %v743, 1.0
    %v775 = vadd.f32 %v745, 1.0
    %v776 = vadd.f32 %v747, 1.0
    %v777 = vadd.f32 %v749, 1.0
    %v778 = vadd.f32 %v751, 1.0
    %v779 = vadd.f32 %v753, 1.0
    %v780 = vadd.f32 %v755, 1.0
    %v781 = vadd.f32 %v757, 1.0
    %v782 = vadd.f32 %v759, 1.0
    %v783 = vadd.f32 %v761, 1.0
    %v784 = vadd.f32 %v763, 1.0
    %v785 = vadd.f32 %v765, 1.0
    %v786 = vadd.f32 %v767, 1.0
    %v787 = vadd.f32 %v769, 1.0
    %v788 = vadd.f32 %v771, 1.0
    %v789 = vadd.f32 %v773, 1.0
    %v790 = vrcp.pop %v774
    %v791 = vmul.f32 1.0, %v790
    %v792 = vrcp.pop %v775
    %v793 = vmul.f32 1.0, %v792
    %v794 = vrcp.pop %v776
    %v795 = vmul.f32 1.0, %v794
    %v796 = vrcp.pop %v777
    %v797 = vmul.f32 1.0, %v796
    %v798 = vrcp.pop %v778
    %v799 = vmul.f32 1.0, %v798
    %v800 = vrcp.pop %v779
    %v801 = vmul.f32 1.0, %v800
    %v802 = vrcp.pop %v780
    %v803 = vmul.f32 1.0, %v802
    %v804 = vrcp.pop %v781
    %v805 = vmul.f32 1.0, %v804
    %v806 = vrcp.pop %v782
    %v807 = vmul.f32 1.0, %v806
    %v808 = vrcp.pop %v783
    %v809 = vmul.f32 1.0, %v808
    %v810 = vrcp.pop %v784
    %v811 = vmul.f32 1.0, %v810
    %v812 = vrcp.pop %v785
    %v813 = vmul.f32 1.0, %v812
    %v814 = vrcp.pop %v786
    %v815 = vmul.f32 1.0, %v814
    %v816 = vrcp.pop %v787
    %v817 = vmul.f32 1.0, %v816
    %v818 = vrcp.pop %v788
    %v819 = vmul.f32 1.0, %v818
    %v820 = vrcp.pop %v789
    %v821 = vmul.f32 1.0, %v820
    %vm822 = vcmask 7168
    %823 = vst.msk [vmem:[#allocation3] sm:$0xff] %vm822, %v791
    %824 = vst.msk [vmem:[#allocation3 + $0x8] sm:$0xff] %vm822, %v793
    %825 = vst.msk [vmem:[#allocation3 + $0x10] sm:$0xff] %vm822, %v795
    %826 = vst.msk [vmem:[#allocation3 + $0x18] sm:$0xff] %vm822, %v797
    %827 = vst.msk [vmem:[#allocation3 + $0x20] sm:$0xff] %vm822, %v799
    %828 = vst.msk [vmem:[#allocation3 + $0x28] sm:$0xff] %vm822, %v801
    %829 = vst.msk [vmem:[#allocation3 + $0x30] sm:$0xff] %vm822, %v803
    %830 = vst.msk [vmem:[#allocation3 + $0x38] sm:$0xff] %vm822, %v805
    %831 = vst.msk [vmem:[#allocation3 + $0x40] sm:$0xff] %vm822, %v807
    %832 = vst.msk [vmem:[#allocation3 + $0x48] sm:$0xff] %vm822, %v809
    %833 = vst.msk [vmem:[#allocation3 + $0x50] sm:$0xff] %vm822, %v811
    %834 = vst.msk [vmem:[#allocation3 + $0x58] sm:$0xff] %vm822, %v813
    %835 = vst.msk [vmem:[#allocation3 + $0x60] sm:$0xff] %vm822, %v815
    %836 = vst.msk [vmem:[#allocation3 + $0x68] sm:$0xff] %vm822, %v817
    %837 = vst.msk [vmem:[#allocation3 + $0x70] sm:$0xff] %vm822, %v819
    %838 = vst.msk [vmem:[#allocation3 + $0x78] sm:$0xff] %vm822, %v821
    // Predicated region
    $region30: #{tpu_custom_call.1} parent=1 // pred_check
      _
    $region31: #{tpu_custom_call.1} parent=1 // pred_check_branch
      %840 = sbr.rel (0) target = $region33
    $region32: #{tpu_custom_call.1} parent=1 // pred_region
      // Predicated region
      $region34: #{tpu_custom_call.1} parent=32 // pred_check
        _
      $region35: #{tpu_custom_call.1} parent=32 // pred_check_branch
        %842 = sbr.rel (0) target = $region37
      $region36: #{tpu_custom_call.1} parent=32 // pred_region
        // Predicated region
        $region38: #{tpu_custom_call.1} parent=36 // pred_check
          _
        $region39: #{tpu_custom_call.1} parent=36 // pred_check_branch
          %844 = sbr.rel (0) target = $region41
        $region40: #{tpu_custom_call.1} parent=36 // pred_region
          // Predicated region
          $region53: #{tpu_custom_call.1} parent=40 // pred_check
            _
          $region54: #{tpu_custom_call.1} parent=40 // pred_check_branch
            %859 = sbr.rel (0) target = $region56
          $region55: #{tpu_custom_call.1} parent=40 // pred_region
            loop: start=0, step=1, limit=1
            $region57: #{tpu_custom_call.1} parent=55 // loop_pre_header
              _
            $region58: #{tpu_custom_call.1} parent=55 // loop_header
              %s861 = sphi 0, %s865
              %p862 = scmp.ge.s32.totalorder %s861, 1
              %s866 = sphi [#allocation3], [#allocation3]
              %s867 = sphi %s7, %s7
            $region59: #{tpu_custom_call.1} parent=55 // loop_header_branch
              %864 = sbr.rel (%p862) target = $region63
            $region60: #{tpu_custom_call.1} parent=55 // loop_body
              %v868 = vld [vmem:[%s866] sm:$0xff]
              %869 = vst [vmem:[%s867] sm:$0xff] %v868
            $region61: #{tpu_custom_call.1} parent=55 // loop_footer
              %s865 = sadd.s32 1, %s861
            $region62: #{tpu_custom_call.1} parent=55 // loop_footer_branch
              %860 = sbr.rel target = $region58
            $region63: #{tpu_custom_call.1} parent=55 // loop_exit
              _
          $region56: #{tpu_custom_call.1} parent=40 // pred_fallthru
            _
          // Predicated region
          $region64: #{tpu_custom_call.1} parent=40 // pred_check
            _
          $region65: #{tpu_custom_call.1} parent=40 // pred_check_branch
            %871 = sbr.rel target = $region67
          $region66: #{tpu_custom_call.1} parent=40 // pred_region
            _
          $region67: #{tpu_custom_call.1} parent=40 // pred_fallthru
            _
        $region41: #{tpu_custom_call.1} parent=36 // pred_fallthru
          _
        // Predicated region
        $region42: #{tpu_custom_call.1} parent=36 // pred_check
          _
        $region43: #{tpu_custom_call.1} parent=36 // pred_check_branch
          %846 = sbr.rel target = $region45
        $region44: #{tpu_custom_call.1} parent=36 // pred_region
          loop: start=0, step=1, limit=1
          $region46: #{tpu_custom_call.1} parent=44 // loop_pre_header
            _
          $region47: #{tpu_custom_call.1} parent=44 // loop_header
            %s849 = sphi 0, %s853
            %p850 = scmp.ge.s32.totalorder %s849, 1
            %s854 = sphi [#allocation3], [#allocation3]
            %s855 = sphi %s7, %s7
          $region48: #{tpu_custom_call.1} parent=44 // loop_header_branch
            %852 = sbr.rel (%p850) target = $region52
          $region49: #{tpu_custom_call.1} parent=44 // loop_body
            %v856 = vld [vmem:[%s854] sm:$0xff]
            %857 = vst [vmem:[%s855] sm:$0xff] %v856
          $region50: #{tpu_custom_call.1} parent=44 // loop_footer
            %s853 = sadd.s32 1, %s849
          $region51: #{tpu_custom_call.1} parent=44 // loop_footer_branch
            %848 = sbr.rel target = $region47
          $region52: #{tpu_custom_call.1} parent=44 // loop_exit
            _
        $region45: #{tpu_custom_call.1} parent=36 // pred_fallthru
          _
      $region37: #{tpu_custom_call.1} parent=32 // pred_fallthru
        _
      %872 = vnop
    $region33: #{tpu_custom_call.1} parent=1 // pred_fallthru
      _
    // Predicated region
    $region68: #{tpu_custom_call.1} parent=1 // pred_check
      _
    $region69: #{tpu_custom_call.1} parent=1 // pred_check_branch
      %874 = sbr.rel (0) target = $region71
    $region70: #{tpu_custom_call.1} parent=1 // pred_region
      _
    $region71: #{tpu_custom_call.1} parent=1 // pred_fallthru
      _

</llo_original>
